<compile_context>
chip_gen: v6e
topology: v6e:2x2x1
jax: 0.10.0
libtpu: 0.0.40
codegen_flags: <defaults>
</compile_context>

<pallas_src>
import jax
import jax.numpy as jnp
from jax.experimental import pallas as pl
from jax.experimental.pallas import tpu as pltpu

_LANES = 128


def _identity_copy_kernel(src_ref, out_ref):
    # forward(): return self.imask  -> identity copy through VMEM.
    out_ref[...] = src_ref[...]


def feature_mask_forward(imask: jax.Array) -> jax.Array:
    """FeatureMask.forward(): return the registered buffer. Zero-copy."""
    return imask


@jax.jit
def feature_mask_forward_pallas(imask: jax.Array) -> jax.Array:
    """Pallas pass-through of the mask buffer (for composition in pipelines).

    Large masks are viewed lane-dense as (rows, 128) and row-tiled with an
    automatically pipelined, megacore-parallel grid; small / oddly shaped
    masks fall back to a single full-array VMEM block (always legal).
    """
    out_features, fan_in = imask.shape
    n = out_features * fan_in
    dtype = imask.dtype

    # Sub-32-bit dtypes pack along sublanes: min second-to-last tile dim is
    # 8 * (4 // itemsize)  (8 for i32, 16 for i16, 32 for i8).
    sublane = 8 * max(1, 4 // jnp.dtype(dtype).itemsize)

    if n % (sublane * _LANES) == 0:
        rows = n // _LANES
        x = imask.reshape(rows, _LANES)  # lane-dense view (free reshape, row-major)
        # Largest row block that divides `rows`, keeps sublane alignment and
        # stays in the measured 512-2048-row sweet spot.
        max_rows = 1024
        block_rows = sublane
        for cand in range(sublane, min(rows, max_rows) + 1, sublane):
            if rows % cand == 0:
                block_rows = cand
        grid = (rows // block_rows,)
        out = pl.pallas_call(
            _identity_copy_kernel,
            out_shape=jax.ShapeDtypeStruct((rows, _LANES), dtype),
            grid=grid,
            in_specs=[pl.BlockSpec((block_rows, _LANES), lambda i: (i, 0))],
            out_specs=pl.BlockSpec((block_rows, _LANES), lambda i: (i, 0)),
            input_output_aliases={0: 0},  # output aliases input: no extra HBM buffer
            compiler_params=pltpu.CompilerParams(
                dimension_semantics=("parallel",)),  # 2-TC sharding on v7x
        )(x)
        return out.reshape(out_features, fan_in)

    # Small / non-aligned masks: whole array as one VMEM-resident block
    # (full-extent residency, no (8,128) divisibility concern).
    return pl.pallas_call(
        _identity_copy_kernel,
        out_shape=jax.ShapeDtypeStruct(imask.shape, dtype),
        in_specs=[pl.BlockSpec(memory_space=pltpu.MemorySpace.VMEM)],
        out_specs=pl.BlockSpec(memory_space=pltpu.MemorySpace.VMEM),
        input_output_aliases={0: 0},
    )(imask)


def make_imask(key, in_features: int, out_features: int, fan_in: int) -> jax.Array:
    """Vectorized equivalent of FeatureMask.reset_parameters().

    Row i is a uniform random sample (without replacement) of `fan_in`
    indices from [0, in_features), sorted -- same distribution as
    torch.sort(torch.randperm(in_features)[:fan_in]).
    """
    # TODO(synk): PyTorch stores the buffer as int64 and draws from torch's
    # global RNG stream; here we use the narrowest integer dtype that fits
    # (HBM-traffic win) and JAX PRNG keys, so values are distributionally
    # (not bit-wise) equivalent.
    if in_features <= 127:
        dtype = jnp.int8
    elif in_features <= 32767:
        dtype = jnp.int16
    else:
        dtype = jnp.int32
    # argsort of iid uniforms == one uniform random permutation per row.
    u = jax.random.uniform(key, (out_features, in_features))
    perm = jnp.argsort(u, axis=1)[:, :fan_in]
    return jnp.sort(perm, axis=1).astype(dtype)


if __name__ == "__main__":
    # Small shapes consistent with the module's __init__ (single-block path).
    in_features, out_features, fan_in = 16, 8, 4
    imask = make_imask(jax.random.PRNGKey(0), in_features, out_features, fan_in)

    # The faithful forward(): just the buffer, zero copies.
    assert feature_mask_forward(imask) is imask

    out = jax.block_until_ready(feature_mask_forward_pallas(imask))
    assert out.shape == (out_features, fan_in)
    assert out.dtype == imask.dtype
    assert bool(jnp.all(out == imask))
    # Each row sorted and within [0, in_features).
    assert bool(jnp.all(out[:, 1:] >= out[:, :-1]))
    assert bool(jnp.all((out >= 0) & (out < in_features)))

    # Larger mask: exercises the lane-dense, row-tiled, megacore-parallel path
    # (int16, 8192*32 elems -> (2048, 128) view, 1024-row blocks, grid=(2,)).
    in2, of2, fi2 = 1024, 8192, 32
    imask2 = make_imask(jax.random.PRNGKey(1), in2, of2, fi2)
    out2 = jax.block_until_ready(feature_mask_forward_pallas(imask2))
    assert out2.shape == (of2, fi2) and out2.dtype == imask2.dtype
    assert bool(jnp.all(out2 == imask2))
    assert bool(jnp.all(out2[:, 1:] >= out2[:, :-1]))
    assert bool(jnp.all((out2 >= 0) & (out2 < in2)))

    print("KERNEL_OK")
</pallas_src>

<mosaic_0001>
module attributes {stable_mosaic.version = 11 : i64} {
  func.func @_identity_copy_kernel(%arg0: memref<8x4xi8, #tpu.memory_space<vmem>>, %arg1: memref<8x4xi8, #tpu.memory_space<vmem>>) attributes {dimension_semantics = [], scalar_prefetch = 0 : i64, scratch_operands = 0 : i64, tpu.core_type = #tpu.core_type<tc>} {
    %c0 = arith.constant 0 : index
    %c0_0 = arith.constant 0 : index
    %0 = vector.load %arg0[%c0, %c0_0] : memref<8x4xi8, #tpu.memory_space<vmem>>, vector<8x4xi8>
    %c0_1 = arith.constant 0 : index
    %c0_2 = arith.constant 0 : index
    %1 = vector.load %arg1[%c0_1, %c0_2] : memref<8x4xi8, #tpu.memory_space<vmem>>, vector<8x4xi8>
    tpu.vector_store %arg1[%c0_1, %c0_2], %0 {strides = array<i32>} : memref<8x4xi8, #tpu.memory_space<vmem>>, vector<8x4xi8>,
    return
  }
}

</mosaic_0001>

<llo_original>
// kernel: feature_mask_forward_pallas.1
$region0: #{feature_mask_forward_pallas.1}
  #allocation0 [shape = 'u32[]', space=smem, size = 0x4, offset = 0x4, fixed_abs, tag = 'smem constant byte address 0x4 - core index']
  #allocation1 [shape = 'u32[144,128]{1,0:T(1,128)}', space=vmem, size = 0x12000, scoped, tag = 'internal scratch']
  %s0 = inlined_call_operand.vmem [shape: s8[8,4], index: 0, kind: input, shape index: {}, may-alias: {0,1}]
  %s1 = inlined_call_operand.vmem [shape: s8[8,4], index: 1, kind: output, shape index: {}, may-alias: {0,1}]
  %s2 = sld [smem:[#allocation0]]
  $region14: #{feature_mask_forward_pallas.1} parent=0
    _
  %s4 = ssub.s32 1, %s2
  %s5 = scalar_select 0, %s4, %s2
  // Predicated region
  $region2: #{feature_mask_forward_pallas.1} parent=0 // pred_check
    _
  $region3: #{feature_mask_forward_pallas.1} parent=0 // pred_check_branch
    %7 = sbr.rel (0) target = $region5
  $region4: #{feature_mask_forward_pallas.1} parent=0 // pred_region
    _
  $region5: #{feature_mask_forward_pallas.1} parent=0 // pred_fallthru
    _
  %v8 = vld [vmem:[%s0] sm:$0x3]
  %vm9 = vcmask 25600
  %10 = vst.msk [vmem:[%s1] sm:$0x3] %vm9, %v8
  // Predicated region
  $region6: #{feature_mask_forward_pallas.1} parent=0 // pred_check
    _
  $region7: #{feature_mask_forward_pallas.1} parent=0 // pred_check_branch
    %12 = sbr.rel (0) target = $region9
  $region8: #{feature_mask_forward_pallas.1} parent=0 // pred_region
    _
  $region9: #{feature_mask_forward_pallas.1} parent=0 // pred_fallthru
    _
  // Predicated region
  $region10: #{feature_mask_forward_pallas.1} parent=0 // pred_check
    _
  $region11: #{feature_mask_forward_pallas.1} parent=0 // pred_check_branch
    %14 = sbr.rel (0) target = $region13
  $region12: #{feature_mask_forward_pallas.1} parent=0 // pred_region
    _
  $region13: #{feature_mask_forward_pallas.1} parent=0 // pred_fallthru
    _

</llo_original>
